<compile_context>
chip_gen: v6e
topology: v6e:2x2x1
jax: 0.10.0
libtpu: 0.0.40
codegen_flags: <defaults>
</compile_context>

<pallas_src>
import numpy as np
import jax
import jax.numpy as jnp
from jax.experimental import pallas as pl
from jax.experimental.pallas import tpu as pltpu


def _feature_dropout_kernel(keep_ref, x_ref, o_ref):
    # keep_ref: VMEM (BLK, 1)  - 1.0 keep / 0.0 drop, per (sample, channel)
    # x_ref:    VMEM (BLK, HW) - input feature rows
    # o_ref:    VMEM (BLK, HW) - output
    o_ref[...] = x_ref[...] * keep_ref[...]   # broadcast over the lane axis


def _sublane_pack(dtype) -> int:
    # sublane packing: 8 rows for 4-byte, 16 for 2-byte, 32 for 1-byte dtypes
    itemsize = jnp.dtype(dtype).itemsize
    return max(8, 32 // max(1, itemsize))


def random_feature_dropout(x, key, p=0.5, training=True):
    """Pallas implementation of RandomDropout.forward.

    x: (N, C, *spatial) array (NCHW-style layout, like the PyTorch module).
    """
    if (not training) or p == 0.0:
        return x

    N, C = x.shape[0], x.shape[1]
    spatial = int(np.prod(x.shape[2:])) if x.ndim > 2 else 1
    nc = N * C

    # theta ~ U(0, p); drop each (n, c) channel with prob theta, no rescaling.
    k_theta, k_mask = jax.random.split(key)
    theta = jax.random.uniform(k_theta, (), minval=0.0, maxval=p)
    u = jax.random.uniform(k_mask, (nc, 1), dtype=jnp.float32)
    keep = (u >= theta).astype(x.dtype)                       # (N*C, 1)

    x2 = x.reshape(nc, spatial)
    # NOTE: for best store bandwidth the spatial extent should be a multiple
    # of 128 (true for typical feature maps; the demo uses 16*16 = 256).

    # ---- row-tile size: ~2 MiB per tile, multiple of the sublane packing ---
    itemsize = jnp.dtype(x.dtype).itemsize
    sub = _sublane_pack(x.dtype)
    target_bytes = 2 * 1024 * 1024
    blk = max(sub, target_bytes // max(1, spatial * itemsize))
    blk = (blk // sub) * sub
    nc_ceil = ((nc + sub - 1) // sub) * sub
    blk = min(blk, nc_ceil)

    # pad rows so the grid divides evenly (padded rows are dropped afterwards)
    nc_pad = ((nc + blk - 1) // blk) * blk
    if nc_pad != nc:
        x2 = jnp.pad(x2, ((0, nc_pad - nc), (0, 0)))
        keep = jnp.pad(keep, ((0, nc_pad - nc), (0, 0)))
    grid = (nc_pad // blk,)

    out2 = pl.pallas_call(
        _feature_dropout_kernel,
        out_shape=jax.ShapeDtypeStruct((nc_pad, spatial), x2.dtype),
        grid=grid,
        in_specs=[
            pl.BlockSpec((blk, 1), lambda i: (i, 0)),        # keep mask
            pl.BlockSpec((blk, spatial), lambda i: (i, 0)),  # x rows
        ],
        out_specs=pl.BlockSpec((blk, spatial), lambda i: (i, 0)),
        compiler_params=pltpu.CompilerParams(
            dimension_semantics=("parallel",),               # v7x megacore
        ),
    )(keep, x2)

    if nc_pad != nc:
        out2 = out2[:nc]
    return out2.reshape(x.shape)
    # TODO(synk): optional inplace variant (input_output_aliases) that only
    # DMA-zeros dropped channels to cut HBM traffic; not needed for parity.


def _check_pure_channel_dropout(x, y):
    """Every (n, c) channel must be exactly kept (unscaled) or all zeros."""
    N, C = x.shape[0], x.shape[1]
    hw = int(np.prod(x.shape[2:])) if x.ndim > 2 else 1
    x_np = np.asarray(x).reshape(N * C, hw)
    y_np = np.asarray(y).reshape(N * C, hw)
    for r in range(N * C):
        kept = np.allclose(y_np[r], x_np[r])
        dropped = np.allclose(y_np[r], 0.0)
        assert kept or dropped, f"row {r}: not a pure keep/drop of the channel"


if __name__ == "__main__":
    key = jax.random.PRNGKey(0)
    k_data, k_drop, k_data2, k_drop2 = jax.random.split(key, 4)

    # Small NCHW input consistent with the module's usage on feature maps.
    N, C, H, W = 2, 4, 16, 16
    x = jax.random.normal(k_data, (N, C, H, W), dtype=jnp.float32)

    y = random_feature_dropout(x, k_drop, p=0.5, training=True)
    y = jax.block_until_ready(y)
    assert y.shape == x.shape and y.dtype == x.dtype
    _check_pure_channel_dropout(x, y)

    # Second shape with N*C not a multiple of the sublane tile, exercising
    # the row-padding path.
    x2 = jax.random.normal(k_data2, (3, 5, 16, 16), dtype=jnp.float32)
    y2 = random_feature_dropout(x2, k_drop2, p=0.5, training=True)
    y2 = jax.block_until_ready(y2)
    assert y2.shape == x2.shape and y2.dtype == x2.dtype
    _check_pure_channel_dropout(x2, y2)

    # eval / p==0 short-circuits return the input unchanged
    assert random_feature_dropout(x, k_drop, p=0.5, training=False) is x
    assert random_feature_dropout(x, k_drop, p=0.0, training=True) is x

    print("KERNEL_OK")
</pallas_src>

<mosaic_0001>
module attributes {stable_mosaic.version = 11 : i64} {
  func.func @_feature_dropout_kernel(%arg0: i32, %arg1: memref<8x1xf32, #tpu.memory_space<vmem>>, %arg2: memref<8x256xf32, #tpu.memory_space<vmem>>, %arg3: memref<8x256xf32, #tpu.memory_space<vmem>>) attributes {dimension_semantics = [#tpu.dimension_semantics<parallel>], iteration_bounds = array<i64: 1>, scalar_prefetch = 0 : i64, scratch_operands = 0 : i64, tpu.core_type = #tpu.core_type<tc>, window_params = [{transform_indices = @transform_0, window_bounds = array<i64: 8, 1>}, {transform_indices = @transform_1, window_bounds = array<i64: 8, 256>}, {transform_indices = @transform_2, window_bounds = array<i64: 8, 256>}]} {
    %c0 = arith.constant 0 : index
    %c0_0 = arith.constant 0 : index
    %0 = vector.load %arg2[%c0, %c0_0] : memref<8x256xf32, #tpu.memory_space<vmem>>, vector<8x256xf32>
    %c0_1 = arith.constant 0 : index
    %c0_2 = arith.constant 0 : index
    %1 = vector.load %arg1[%c0_1, %c0_2] : memref<8x1xf32, #tpu.memory_space<vmem>>, vector<8x1xf32>
    %2 = vector.broadcast %1 : vector<8x1xf32> to vector<8x256xf32>
    %3 = arith.mulf %0, %2 : vector<8x256xf32>
    %c0_3 = arith.constant 0 : index
    %c0_4 = arith.constant 0 : index
    %4 = vector.load %arg3[%c0_3, %c0_4] : memref<8x256xf32, #tpu.memory_space<vmem>>, vector<8x256xf32>
    tpu.vector_store %arg3[%c0_3, %c0_4], %3 {strides = array<i32>} : memref<8x256xf32, #tpu.memory_space<vmem>>, vector<8x256xf32>,
    return
  }
  func.func @transform_0(%arg0: i32) -> (i32, i32) {
    %c0_i32 = arith.constant 0 : i32
    %c0_i32_0 = arith.constant 0 : i32
    return %arg0, %c0_i32 : i32, i32
  }
  func.func @transform_1(%arg0: i32) -> (i32, i32) {
    %c0_i32 = arith.constant 0 : i32
    %c0_i32_0 = arith.constant 0 : i32
    return %arg0, %c0_i32 : i32, i32
  }
  func.func @transform_2(%arg0: i32) -> (i32, i32) {
    %c0_i32 = arith.constant 0 : i32
    %c0_i32_0 = arith.constant 0 : i32
    return %arg0, %c0_i32 : i32, i32
  }
}

</mosaic_0001>

<llo_original>
// kernel: tpu_custom_call.1
$region0: #{tpu_custom_call.1}
  #allocation0 [shape = 'u32[]', space=smem, size = 0x4, offset = 0x4, fixed_abs, tag = 'smem constant byte address 0x4 - core index']
  #allocation1 [shape = 'u32[144,128]{1,0:T(1,128)}', space=vmem, size = 0x12000, scoped, tag = 'internal scratch']
  %s0 = inlined_call_operand.vmem [shape: f32[8,1], index: 0, kind: input, shape index: {}]
  %s1 = inlined_call_operand.hbm [shape: f32[8,256], index: 1, kind: input, shape index: {}]
  %s2 = inlined_call_operand.hbm [shape: f32[8,256], index: 2, kind: output, shape index: {}]
  %s3 = sld [smem:[#allocation0]]
  $region22: #{tpu_custom_call.1} parent=0
    _
  %s5 = ssub.s32 1, %s3
  %s6 = scalar_select 0, %s5, %s3
  $region1: #{tpu_custom_call.1} parent=0
    #allocation2 [shape = 'u8[8192]{0}', space=vmem, size = 0x2000, scoped, tag = 'input window, operand 1, single buffered']
    #allocation3 [shape = 's32[1]{0}', space=sflag, size = 0x4, scoped, tag = 'scoped memory for tpu_custom_call.1']
    #allocation4 [shape = 's32[1]{0}', space=sflag, size = 0x4, scoped, tag = 'scoped memory for tpu_custom_call.1']
    #allocation5 [shape = 'u8[8192]{0}', space=vmem, size = 0x2000, scoped, tag = 'output window, operand 0, single buffered']
    %7 = vsyncpa [#allocation3], 0
    %8 = vsyncpa [#allocation4], 0
    // Predicated region
    $region2: #{tpu_custom_call.1} parent=1 // pred_check
      _
    $region3: #{tpu_custom_call.1} parent=1 // pred_check_branch
      %10 = sbr.rel (0) target = $region5
    $region4: #{tpu_custom_call.1} parent=1 // pred_region
      _
    $region5: #{tpu_custom_call.1} parent=1 // pred_fallthru
      _
    // Predicated region
    $region6: #{tpu_custom_call.1} parent=1 // pred_check
      _
    $region7: #{tpu_custom_call.1} parent=1 // pred_check_branch
      %12 = sbr.rel (0) target = $region9
    $region8: #{tpu_custom_call.1} parent=1 // pred_region
      %s14 = ssub.s32 256, 256
      %15 = vsyncadd [#allocation3], %s14
      %s17 = sshll.u32 [#allocation2], 4
      %s18 = int_to_ptr.vmem [resolvable:$true] %s17
      %20 = dma.hbm_to_vmem [thread:$0]  %s1, 256, %s18, [#allocation3]
    $region9: #{tpu_custom_call.1} parent=1 // pred_fallthru
      _
    // Predicated region
    $region10: #{tpu_custom_call.1} parent=1 // pred_check
      _
    $region11: #{tpu_custom_call.1} parent=1 // pred_check_branch
      %22 = sbr.rel (0) target = $region13
    $region12: #{tpu_custom_call.1} parent=1 // pred_region
      %23 = dma.done [#allocation3], 256
    $region13: #{tpu_custom_call.1} parent=1 // pred_fallthru
      _
    %v24 = vld [vmem:[#allocation2] sm:$0xff]
    %v25 = vld [vmem:[#allocation2 + $0x8] sm:$0xff]
    %v26 = vld [vmem:[%s0] sm:$0xff]
    %28 = vset.pattern.permute.xlu0 0
    %29 = vperm.xlu0 %28, %v26
    %v30 = vpop.permute.xlu0 %29
    %v32 = vmul.f32 %v24, %v30
    %v33 = vmul.f32 %v25, %v30
    %34 = vst [vmem:[#allocation5] sm:$0xff] %v32
    %35 = vst [vmem:[#allocation5 + $0x8] sm:$0xff] %v33
    // Predicated region
    $region14: #{tpu_custom_call.1} parent=1 // pred_check
      _
    $region15: #{tpu_custom_call.1} parent=1 // pred_check_branch
      %37 = sbr.rel (0) target = $region17
    $region16: #{tpu_custom_call.1} parent=1 // pred_region
      %s39 = ssub.s32 256, 256
      %40 = vsyncadd [#allocation4], %s39
      %s42 = sshll.u32 [#allocation5], 4
      %s43 = int_to_ptr.vmem [resolvable:$true] %s42
      %45 = dma.vmem_to_hbm [thread:$0]  %s43, 256, %s2, [#allocation4]
    $region17: #{tpu_custom_call.1} parent=1 // pred_fallthru
      _
    // Predicated region
    $region18: #{tpu_custom_call.1} parent=1 // pred_check
      _
    $region19: #{tpu_custom_call.1} parent=1 // pred_check_branch
      %47 = sbr.rel (0) target = $region21
    $region20: #{tpu_custom_call.1} parent=1 // pred_region
      %48 = dma.done [#allocation4], 256
    $region21: #{tpu_custom_call.1} parent=1 // pred_fallthru
      _
    %49 = vsyncpa [#allocation3], 1
    %50 = vsyncpa [#allocation4], 1

</llo_original>
